<compile_context>
chip_gen: v5e
topology: v5e:2x2
jax: 0.10.0
libtpu: 0.0.40
codegen_flags: <defaults>
</compile_context>

<pallas_src>
import math
import functools

import jax
import jax.numpy as jnp
from jax import lax
from jax.experimental import pallas as pl
from jax.experimental.pallas import tpu as pltpu


def _round_up(x, m):
    return ((x + m - 1) // m) * m


# --------------------------------------------------------------------------
# deepnorm helper (kept for fidelity with the reference; unused downstream
# because the encoder/decoder stacks are not defined in the given source).
# --------------------------------------------------------------------------
def get_deepnorm(enc_layer=0, dec_layer=0):
    if enc_layer == 0:
        if dec_layer == 0:
            return (1.0, 1.0)
        return ((3 * dec_layer) ** (1 / 4), (12 * dec_layer) ** (-1 / 4))
    return (0.81 * (enc_layer ** 4 * dec_layer) ** (1 / 16),
            0.87 * (enc_layer ** 4 * dec_layer) ** (-1 / 16))


# --------------------------------------------------------------------------
# Pallas kernel: routed task projection + label-smoothed CE (+ argmax).
# --------------------------------------------------------------------------
def _proj_loss_kernel(tile_task_ref, x_ref, w_ref, tgt_ref, out_ref, *,
                      smooth, pad_id, vocab_size, with_pred):
    del tile_task_ref          # routing happens in the weight index_map
    TM = x_ref.shape[0]
    Vp = w_ref.shape[2]

    # Single routed MXU matmul (bf16 in, f32 accumulate).  The per-tile task's
    # (Dpp, Vp) weight block was already selected by the scalar-prefetch
    # index_map.  The bias and the -1e30 vocab-padding mask ride in weight
    # row D (x column D holds a constant 1.0), so no separate broadcast /
    # select / add is needed on the VPU.
    logits = jnp.dot(x_ref[...], w_ref[0],
                     preferred_element_type=jnp.float32)          # [TM, Vp] f32

    # Numerically stable log-softmax over the (padded) vocab, f32 throughout.
    m = jnp.max(logits, axis=-1, keepdims=True)                   # [TM, 1]
    shifted = logits - m                                          # pad cols ~ -1e30
    lse = jnp.log(jnp.sum(jnp.exp(shifted), axis=-1, keepdims=True))

    tgt = tgt_ref[...]                                            # [TM, 1] int32
    col = lax.broadcasted_iota(jnp.int32, (TM, Vp), 1)

    # Label-smoothed cross entropy (PAD rows zeroed):  -log p = lse - shifted.
    nll = lse - jnp.sum(jnp.where(col == tgt, shifted, 0.0),
                        axis=-1, keepdims=True)                   # [TM, 1]
    sum_shift = jnp.sum(jnp.where(col < vocab_size, shifted, 0.0),
                        axis=-1, keepdims=True)
    uni = lse - sum_shift * (1.0 / vocab_size)    # mean(-logp) over true vocab
    loss = (1.0 - smooth) * nll + smooth * uni
    loss = jnp.where(tgt == pad_id, 0.0, loss)

    if with_pred:
        # Argmax (first maximal index): shifted == 0 exactly at maxima; padded
        # vocab columns sit at ~-1e30 and can never win.  Packed next to the
        # loss so there is a single output stream per tile.
        pred = jnp.min(jnp.where(shifted == 0.0, col, Vp),
                       axis=-1, keepdims=True).astype(jnp.float32)
        out_ref[:, 0:1] = loss
        out_ref[:, 1:2] = pred
    else:
        out_ref[...] = loss


# --------------------------------------------------------------------------
# Tiling / VMEM heuristics.
# --------------------------------------------------------------------------
def _est_vmem_bytes(tm, dpp, vp):
    return (2 * tm * dpp * 2          # x tile (bf16, double-buffered)
            + 2 * dpp * vp * 2        # routed weight block (bf16, double-buffered)
            + 2 * tm * 4              # target ids
            + 2 * tm * 2 * 4          # packed loss/pred output
            + 8 * tm * vp * 4         # live f32 [TM, Vp] temporaries (generous)
            + (2 << 20))              # slack for compiler-internal scratch


def _pick_tm(m_retro, m_fwd, dpp, vp):
    m_total = m_retro + m_fwd
    if m_total >= 4 * 512:
        tm = 512
    elif m_total >= 4 * 256:
        tm = 256
    elif m_total >= 2 * 128:
        tm = 128
    else:
        # small problems: one tile per task group, >= 2 grid steps when both
        # groups are present (keeps v7x's second TensorCore busy).
        tm = max(8, _round_up(min(max(m_retro, m_fwd, 1), 128), 8))
    # Keep the working set comfortably inside v7x's 64 MiB physical VMEM
    # (v5e / v6e have 128 MiB physical).
    while tm > 8 and _est_vmem_bytes(tm, dpp, vp) > (40 << 20):
        tm = max(8, tm // 2)
    return tm


def _pad_rows(a, n, value=0):
    if n == 0:
        return a
    pad = [(0, n)] + [(0, 0)] * (a.ndim - 1)
    return jnp.pad(a, pad, constant_values=value)


# --------------------------------------------------------------------------
# Wrapper: fused task_project + criterion (+ argmax).
# --------------------------------------------------------------------------
def task_project_loss(hidden, tgt, num_retro, w_stack, b_stack, *, smooth,
                      pad_id, with_pred=True):
    """Fused task-routed projection + label-smoothed CE (+ argmax).

    Assumes batch rows are task-grouped: rows [0, num_retro) are retro (task 0)
    and rows [num_retro, B) are forward (task 1) — the same contract as the
    reference `torch.split(x, num_list, dim=0)`.  Returns (loss_tok[B,S],
    pred[B,S] or None).
    """
    B, S, D = hidden.shape
    V = w_stack.shape[-1]

    Dpp = _round_up(D + 1, 128)        # +1 row: folded bias & vocab-pad mask
    Vp = _round_up(V, 128)             # lane-dense vocab dim

    M = B * S
    M_r = int(num_retro) * S
    M_f = M - M_r

    TM = _pick_tm(M_r, M_f, Dpp, Vp)
    Mpr = _round_up(M_r, TM) if M_r > 0 else 0
    Mpf = _round_up(M_f, TM) if M_f > 0 else 0
    Mp = Mpr + Mpf
    n_tiles = Mp // TM

    # Activations: bf16 cast + bias-ones column + D padding (one fused copy).
    x2d = hidden.reshape(M, D).astype(jnp.bfloat16)
    cols = [x2d, jnp.ones((M, 1), jnp.bfloat16)]
    if Dpp > D + 1:
        cols.append(jnp.zeros((M, Dpp - D - 1), jnp.bfloat16))
    x_aug = jnp.concatenate(cols, axis=1)                         # [M, Dpp]

    # Weights: bias + (-1e30 vocab-pad mask) folded into row D.
    # NOTE: bias lands at bf16 precision (exact here: zero-initialized).
    w = jnp.zeros((2, Dpp, Vp), jnp.bfloat16)
    w = w.at[:, :D, :V].set(w_stack.astype(jnp.bfloat16))
    if Vp > V:
        bias_row = jnp.concatenate(
            [b_stack.astype(jnp.float32),
             jnp.full((2, Vp - V), -1e30, jnp.float32)], axis=1)
    else:
        bias_row = b_stack.astype(jnp.float32)
    w = w.at[:, D, :].set(bias_row.astype(jnp.bfloat16))

    tgt_col = tgt.reshape(M, 1).astype(jnp.int32)

    # Per-task-group row padding so every M-tile is task-pure (skipped when
    # the group sizes already divide TM — the common aligned case).
    tile_tasks = [0] * (Mpr // TM) + [1] * (Mpf // TM)
    if Mpr == M_r and Mpf == M_f:
        x_in, tgt_in = x_aug, tgt_col
    else:
        x_parts, t_parts = [], []
        if M_r > 0:
            x_parts.append(_pad_rows(x_aug[:M_r], Mpr - M_r))
            t_parts.append(_pad_rows(tgt_col[:M_r], Mpr - M_r, value=pad_id))
        if M_f > 0:
            x_parts.append(_pad_rows(x_aug[M_r:], Mpf - M_f))
            t_parts.append(_pad_rows(tgt_col[M_r:], Mpf - M_f, value=pad_id))
        x_in = x_parts[0] if len(x_parts) == 1 else jnp.concatenate(x_parts, 0)
        tgt_in = t_parts[0] if len(t_parts) == 1 else jnp.concatenate(t_parts, 0)
    tile_task = jnp.asarray(tile_tasks, dtype=jnp.int32)          # [n_tiles]

    out_w = 2 if with_pred else 1
    grid_spec = pltpu.PrefetchScalarGridSpec(
        num_scalar_prefetch=1,                     # per-tile task id (SMEM)
        grid=(n_tiles,),
        in_specs=[
            pl.BlockSpec((TM, Dpp), lambda i, tt: (i, 0)),            # hidden
            pl.BlockSpec((1, Dpp, Vp), lambda i, tt: (tt[i], 0, 0)),  # routed W
            pl.BlockSpec((TM, 1), lambda i, tt: (i, 0)),              # targets
        ],
        out_specs=pl.BlockSpec((TM, out_w), lambda i, tt: (i, 0)),    # loss|pred
    )

    vmem_limit = int(min(max(_est_vmem_bytes(TM, Dpp, Vp), 32 << 20), 48 << 20))

    out = pl.pallas_call(
        functools.partial(_proj_loss_kernel, smooth=float(smooth),
                          pad_id=int(pad_id), vocab_size=int(V),
                          with_pred=bool(with_pred)),
        out_shape=jax.ShapeDtypeStruct((Mp, out_w), jnp.float32),
        grid_spec=grid_spec,
        compiler_params=pltpu.CompilerParams(
            dimension_semantics=("parallel",),
            vmem_limit_bytes=vmem_limit),
    )(tile_task, x_in, w, tgt_in)

    # Strip the per-group row padding and restore batch order.
    if Mp == M:
        loss_tok = out[:M, 0].reshape(B, S)
        pred = out[:M, 1].astype(jnp.int32).reshape(B, S) if with_pred else None
        return loss_tok, pred

    l_parts, p_parts = [], []
    if M_r > 0:
        l_parts.append(out[:M_r, 0])
        if with_pred:
            p_parts.append(out[:M_r, 1])
    if M_f > 0:
        l_parts.append(out[Mpr:Mpr + M_f, 0])
        if with_pred:
            p_parts.append(out[Mpr:Mpr + M_f, 1])
    loss_tok = (l_parts[0] if len(l_parts) == 1
                else jnp.concatenate(l_parts)).reshape(B, S)
    pred = None
    if with_pred:
        pred = (p_parts[0] if len(p_parts) == 1
                else jnp.concatenate(p_parts)).astype(jnp.int32).reshape(B, S)
    return loss_tok, pred


# --------------------------------------------------------------------------
# Glue: deterministic params, embeddings, loss/accuracy reductions.
# --------------------------------------------------------------------------
def init_params(key, vocab, d_model):
    V = len(vocab)
    k = jax.random.split(key, 6)
    vocab_emb = jax.random.normal(k[0], (V, d_model), jnp.float32) * 0.02
    vocab_emb = vocab_emb.at[vocab['<PAD>']].set(0.0)          # padding_idx
    class_emb = jax.random.normal(k[1], (11, d_model), jnp.float32) * 0.02
    class_emb = class_emb.at[0].set(0.0)                       # padding_idx
    task_emb = jax.random.normal(k[2], (2, d_model), jnp.float32) * 0.02
    w_retro = jax.random.normal(k[3], (d_model, V), jnp.float32) / math.sqrt(d_model)
    w_fwd = jax.random.normal(k[4], (d_model, V), jnp.float32) / math.sqrt(d_model)
    w_proj = jnp.stack([w_retro, w_fwd], axis=0)               # [2, D, V]
    b_proj = jnp.zeros((2, V), jnp.float32)
    return dict(vocab_emb=vocab_emb, class_emb=class_emb, task_emb=task_emb,
                w_proj=w_proj, b_proj=b_proj)


def smiledit_forward(params, f_class, f_task, tgt, *, vocab, d_model,
                     labelsmooth=0.1, ignore_len=2):
    B, S = tgt.shape
    pad_id = vocab['<PAD>']
    bos_id = vocab['<BOS>']

    # Host-side task split, mirroring `torch.bincount(f_task).tolist()`.
    # The reference model requires task-grouped batches (retro rows first).
    num_retro = int(jnp.sum(f_task == 0))

    # embeddings (glue, gather)
    class_e = jnp.take(params['class_emb'], f_class, axis=0)[:, None, :]  # [B,1,D]
    task_e = jnp.take(params['task_emb'], f_task, axis=0)[:, None, :]     # [B,1,D]
    begin_e = jnp.broadcast_to(params['vocab_emb'][bos_id][None, None, :],
                               (B, 1, d_model))                            # [B,1,D]
    tgt_e = jnp.take(params['vocab_emb'], tgt, axis=0)                     # [B,S,D]
    tgt_emb = jnp.concatenate([class_e, task_e, begin_e, tgt_e], axis=1)
    tgt_emb = tgt_emb * math.sqrt(d_model)
    # dropout is identity in eval mode.

    # TODO(synk): encoder/decoder transformer stack omitted (source not provided).
    hidden = tgt_emb[:, ignore_len:-1, :]                                  # [B,S,D]

    loss_tok, pred = task_project_loss(
        hidden, tgt, num_retro, params['w_proj'], params['b_proj'],
        smooth=labelsmooth, pad_id=pad_id, with_pred=True)

    # get_loss: criterion(...).sum(dim=-1).mean() per task group, averaged
    seq_loss = loss_tok.sum(-1)                                            # [B]
    retro_m = (f_task == 0).astype(jnp.float32)
    fwd_m = (f_task == 1).astype(jnp.float32)
    n_retro, n_fwd = jnp.sum(retro_m), jnp.sum(fwd_m)
    retro_loss = jnp.sum(seq_loss * retro_m) / jnp.maximum(n_retro, 1.0)
    fwd_loss = jnp.sum(seq_loss * fwd_m) / jnp.maximum(n_fwd, 1.0)
    loss_count = (n_retro > 0).astype(jnp.float32) + (n_fwd > 0).astype(jnp.float32)
    loss = (jnp.where(n_retro > 0, retro_loss, 0.0) +
            jnp.where(n_fwd > 0, fwd_loss, 0.0)) / jnp.maximum(loss_count, 1.0)

    # get_accuracy
    padding = tgt == pad_id
    eq = pred == tgt
    denom = jnp.maximum((~padding).sum(-1).astype(jnp.float32), 1.0)
    token_acc = (eq.astype(jnp.float32) * (~padding)).sum(-1) / denom
    seq_acc = jnp.all(eq | padding, axis=-1).astype(jnp.float32)

    def _masked_mean(v, m):
        return jnp.sum(v * m) / jnp.maximum(jnp.sum(m), 1.0)

    retro_acc = {'token': _masked_mean(token_acc, retro_m),
                 'seq': _masked_mean(seq_acc, retro_m)}
    forward_acc = {'token': _masked_mean(token_acc, fwd_m),
                   'seq': _masked_mean(seq_acc, fwd_m)}
    return loss, retro_acc, forward_acc


if __name__ == "__main__":
    vocab = {'<PAD>': 0, '<BOS>': 1, '<EOS>': 2, 'C': 3, 'c': 4, 'O': 5, 'N': 6,
             '(': 7, ')': 8, '=': 9, '1': 10, '2': 11, 'Br': 12, 'Cl': 13,
             'S': 14, 'F': 15}
    d_model = 32
    B, S = 4, 8

    # deepnorm constants (unused downstream; kept for module fidelity)
    _enc_alpha, _enc_beta = get_deepnorm(4, 4)
    _dec_alpha, _dec_beta = get_deepnorm(0, 4)

    key = jax.random.PRNGKey(0)
    kp, kt = jax.random.split(key)
    params = init_params(kp, vocab, d_model)

    # deterministic synthetic batch (dualtask: first rows retro, then fwd —
    # the task-grouped ordering the reference module's num_list split assumes)
    f_task = jnp.array([0, 0, 1, 1], jnp.int32)
    f_class = jnp.array([1, 3, 5, 7], jnp.int32)
    tgt_len = jnp.array([5, 6, 4, 7], jnp.int32)
    body = jax.random.randint(kt, (B, S), 3, len(vocab))
    pos = jnp.arange(S)[None, :]
    tgt = jnp.where(pos < (tgt_len - 1)[:, None], body, vocab['<PAD>'])
    tgt = jnp.where(pos == (tgt_len - 1)[:, None], vocab['<EOS>'], tgt)
    tgt = tgt.astype(jnp.int32)

    loss, retro_acc, forward_acc = smiledit_forward(
        params, f_class, f_task, tgt, vocab=vocab, d_model=d_model,
        labelsmooth=0.1, ignore_len=2)

    loss = jax.block_until_ready(loss)
    jax.block_until_ready(retro_acc['token'])
    jax.block_until_ready(forward_acc['token'])
    assert bool(jnp.isfinite(loss)), "loss is not finite"
    print("KERNEL_OK")
</pallas_src>

<mosaic_0001>
module attributes {stable_mosaic.version = 11 : i64} {
  func.func @_proj_loss_kernel(%arg0: i32, %arg1: memref<2xi32, #tpu.memory_space<smem>>, %arg2: memref<16x128xbf16, #tpu.memory_space<vmem>>, %arg3: memref<1x128x128xbf16, #tpu.memory_space<vmem>>, %arg4: memref<16x1xi32, #tpu.memory_space<vmem>>, %arg5: memref<16x2xf32, #tpu.memory_space<vmem>>) attributes {dimension_semantics = [#tpu.dimension_semantics<parallel>], iteration_bounds = array<i64: 2>, scalar_prefetch = 1 : i64, scratch_operands = 0 : i64, tpu.core_type = #tpu.core_type<tc>, window_params = [{transform_indices = @transform_0, window_bounds = array<i64: 16, 128>}, {transform_indices = @transform_1, window_bounds = array<i64: 1, 128, 128>}, {transform_indices = @transform_2, window_bounds = array<i64: 16, 1>}, {transform_indices = @transform_3, window_bounds = array<i64: 16, 2>}]} {
    %c0 = arith.constant 0 : index
    %c0_0 = arith.constant 0 : index
    %0 = vector.load %arg2[%c0, %c0_0] : memref<16x128xbf16, #tpu.memory_space<vmem>>, vector<16x128xbf16>
    %c0_1 = arith.constant 0 : index
    %c0_2 = arith.constant 0 : index
    %c0_3 = arith.constant 0 : index
    %1 = vector.load %arg3[%c0_1, %c0_2, %c0_3] : memref<1x128x128xbf16, #tpu.memory_space<vmem>>, vector<1x128x128xbf16>
    %2 = vector.shape_cast %1 : vector<1x128x128xbf16> to vector<128x128xbf16>
    %cst = arith.constant dense<0.000000e+00> : vector<16x128xf32>
    %3 = tpu.matmul %0, %2, %cst {dimension_numbers = #tpu.dot_dimension_numbers<[1], [0], [0], [1], [0, 0, 1, 1], [], []>} : vector<16x128xbf16>, vector<128x128xbf16>, vector<16x128xf32> -> vector<16x128xf32>
    %cst_4 = arith.constant dense<0xFF800000> : vector<16xf32>
    %4 = vector.multi_reduction <maximumf>, %3, %cst_4 [1] : vector<16x128xf32> to vector<16xf32>
    %5 = vector.shape_cast %4 : vector<16xf32> to vector<16x1xf32>
    %6 = vector.broadcast %5 : vector<16x1xf32> to vector<16x128xf32>
    %7 = arith.subf %3, %6 : vector<16x128xf32>
    %8 = math.exp %7 : vector<16x128xf32>
    %cst_5 = arith.constant dense<0.000000e+00> : vector<16xf32>
    %9 = vector.multi_reduction <add>, %8, %cst_5 [1] : vector<16x128xf32> to vector<16xf32>
    %10 = vector.shape_cast %9 : vector<16xf32> to vector<16x1xf32>
    %11 = math.log %10 : vector<16x1xf32>
    %c0_6 = arith.constant 0 : index
    %c0_7 = arith.constant 0 : index
    %12 = vector.load %arg4[%c0_6, %c0_7] : memref<16x1xi32, #tpu.memory_space<vmem>>, vector<16x1xi32>
    %13 = tpu.iota {dimensions = array<i32: 1>} : vector<16x128xi32>
    %14 = vector.broadcast %12 : vector<16x1xi32> to vector<16x128xi32>
    %15 = arith.cmpi eq, %13, %14 : vector<16x128xi32>
    %cst_8 = arith.constant 0.000000e+00 : f32
    %16 = vector.broadcast %cst_8 : f32 to vector<16x128xf32>
    %17 = arith.select %15, %7, %16 : vector<16x128xi1>, vector<16x128xf32>
    %cst_9 = arith.constant dense<0.000000e+00> : vector<16xf32>
    %18 = vector.multi_reduction <add>, %17, %cst_9 [1] : vector<16x128xf32> to vector<16xf32>
    %19 = vector.shape_cast %18 : vector<16xf32> to vector<16x1xf32>
    %20 = arith.subf %11, %19 : vector<16x1xf32>
    %c16_i32 = arith.constant 16 : i32
    %21 = vector.broadcast %c16_i32 : i32 to vector<16x128xi32>
    %22 = arith.cmpi slt, %13, %21 : vector<16x128xi32>
    %cst_10 = arith.constant 0.000000e+00 : f32
    %23 = vector.broadcast %cst_10 : f32 to vector<16x128xf32>
    %24 = arith.select %22, %7, %23 : vector<16x128xi1>, vector<16x128xf32>
    %cst_11 = arith.constant dense<0.000000e+00> : vector<16xf32>
    %25 = vector.multi_reduction <add>, %24, %cst_11 [1] : vector<16x128xf32> to vector<16xf32>
    %26 = vector.shape_cast %25 : vector<16xf32> to vector<16x1xf32>
    %cst_12 = arith.constant 6.250000e-02 : f32
    %27 = vector.broadcast %cst_12 : f32 to vector<16x1xf32>
    %28 = arith.mulf %26, %27 : vector<16x1xf32>
    %29 = arith.subf %11, %28 : vector<16x1xf32>
    %cst_13 = arith.constant 0.899999976 : f32
    %30 = vector.broadcast %cst_13 : f32 to vector<16x1xf32>
    %31 = arith.mulf %30, %20 : vector<16x1xf32>
    %cst_14 = arith.constant 1.000000e-01 : f32
    %32 = vector.broadcast %cst_14 : f32 to vector<16x1xf32>
    %33 = arith.mulf %32, %29 : vector<16x1xf32>
    %34 = arith.addf %31, %33 : vector<16x1xf32>
    %c0_i32 = arith.constant 0 : i32
    %35 = vector.broadcast %c0_i32 : i32 to vector<16x1xi32>
    %36 = arith.cmpi eq, %12, %35 : vector<16x1xi32>
    %cst_15 = arith.constant 0.000000e+00 : f32
    %37 = vector.broadcast %cst_15 : f32 to vector<16x1xf32>
    %38 = arith.select %36, %37, %34 : vector<16x1xi1>, vector<16x1xf32>
    %cst_16 = arith.constant 0.000000e+00 : f32
    %39 = vector.broadcast %cst_16 : f32 to vector<16x128xf32>
    %40 = arith.cmpf oeq, %7, %39 : vector<16x128xf32>
    %c128_i32 = arith.constant 128 : i32
    %41 = vector.broadcast %c128_i32 : i32 to vector<16x128xi32>
    %42 = arith.select %40, %13, %41 : vector<16x128xi1>, vector<16x128xi32>
    %cst_17 = arith.constant dense<2147483647> : vector<16xi32>
    %43 = vector.multi_reduction <minsi>, %42, %cst_17 [1] : vector<16x128xi32> to vector<16xi32>
    %44 = vector.shape_cast %43 : vector<16xi32> to vector<16x1xi32>
    %45 = arith.sitofp %44 : vector<16x1xi32> to vector<16x1xf32>
    %c0_18 = arith.constant 0 : index
    %c0_19 = arith.constant 0 : index
    %46 = vector.load %arg5[%c0_18, %c0_19] : memref<16x2xf32, #tpu.memory_space<vmem>>, vector<16x1xf32>
    tpu.vector_store %arg5[%c0_18, %c0_19], %38 {strides = array<i32>} : memref<16x2xf32, #tpu.memory_space<vmem>>, vector<16x1xf32>,
    %c0_20 = arith.constant 0 : index
    %c1 = arith.constant 1 : index
    %47 = vector.load %arg5[%c0_20, %c1] : memref<16x2xf32, #tpu.memory_space<vmem>>, vector<16x1xf32>
    tpu.vector_store %arg5[%c0_20, %c1], %45 {strides = array<i32>} : memref<16x2xf32, #tpu.memory_space<vmem>>, vector<16x1xf32>,
    return
  }
  func.func @transform_0(%arg0: i32, %arg1: memref<2xi32, #tpu.memory_space<smem>>) -> (i32, i32) {
    %c0_i32 = arith.constant 0 : i32
    %c0_i32_0 = arith.constant 0 : i32
    return %arg0, %c0_i32 : i32, i32
  }
  func.func @transform_1(%arg0: i32, %arg1: memref<2xi32, #tpu.memory_space<smem>>) -> (i32, i32, i32) {
    %0 = arith.index_cast %arg0 : i32 to index
    %1 = memref.load %arg1[%0] : memref<2xi32, #tpu.memory_space<smem>>
    %c0_i32 = arith.constant 0 : i32
    %c0_i32_0 = arith.constant 0 : i32
    %c0_i32_1 = arith.constant 0 : i32
    return %1, %c0_i32, %c0_i32_0 : i32, i32, i32
  }
  func.func @transform_2(%arg0: i32, %arg1: memref<2xi32, #tpu.memory_space<smem>>) -> (i32, i32) {
    %c0_i32 = arith.constant 0 : i32
    %c0_i32_0 = arith.constant 0 : i32
    return %arg0, %c0_i32 : i32, i32
  }
  func.func @transform_3(%arg0: i32, %arg1: memref<2xi32, #tpu.memory_space<smem>>) -> (i32, i32) {
    %c0_i32 = arith.constant 0 : i32
    %c0_i32_0 = arith.constant 0 : i32
    return %arg0, %c0_i32 : i32, i32
  }
}

</mosaic_0001>

<llo_original>
// kernel: tpu_custom_call.1
$region0: #{tpu_custom_call.1}
  #allocation0 [shape = 'u32[]', space=smem, size = 0x4, offset = 0x4, fixed_abs, tag = 'smem constant byte address 0x4 - core index']
  #allocation1 [shape = 'u32[72,128]{1,0:T(1,128)}', space=vmem, size = 0x9000, scoped, tag = 'internal scratch']
  #allocation2 [shape = 's32[1]{0}', space=sflag, size = 0x4, scoped, tag = 'scoped memory for tpu_custom_call.1']
  #allocation3 [shape = 'u8[512]{0}', space=smem, size = 0x200, scoped, tag = 'prefetched SMEM operand 0']
  %s0 = inlined_call_operand.vmem [shape: s32[2], index: 0, kind: input, shape index: {}]
  %s1 = inlined_call_operand.vmem [shape: bf16[32,128], index: 1, kind: input, shape index: {}]
  %s2 = inlined_call_operand.hbm [shape: bf16[2,128,128], index: 2, kind: input, shape index: {}]
  %s3 = inlined_call_operand.vmem [shape: s32[32,1], index: 3, kind: input, shape index: {}]
  %s4 = inlined_call_operand.vmem [shape: f32[32,2], index: 4, kind: output, shape index: {}]
  %s5 = sld [smem:[#allocation0]]
  $region49: #{tpu_custom_call.1} parent=0
    _
  %s7 = ssub.s32 1, %s5
  %s8 = scalar_select 0, %s7, %s5
  %s10 = sshll.u32 %s0, 4
  %s11 = int_to_ptr.vmem [resolvable:$true] %s10
  %13 = dma.vmem_to_smem %s11, 16, [#allocation3], [#allocation2]
  %15 = dma.done [#allocation2], 16
  %16 = sfence
  $region1: #{tpu_custom_call.1} parent=0
    #allocation4 [shape = 'u8[65536]{0}', space=vmem, size = 0x10000, scoped, tag = 'input window, operand 2']
    #allocation5 [shape = 's32[2]{0}', space=sflag, size = 0x8, scoped, tag = 'scoped memory for tpu_custom_call.1']
    %17 = vsyncpa [#allocation5], 0
    %s18 = scalar_lea.sflag [#allocation5], 1
    %19 = vsyncpa %s18, 0
    loop: start=0, step=1, limit=4
    $region2: #{tpu_custom_call.1} parent=1 // loop_pre_header
      _
    $region3: #{tpu_custom_call.1} parent=1 // loop_header
      %s21 = sphi 0, %s25
      %p22 = scmp.ge.s32.totalorder %s21, 4
      %s31 = sphi 0, %s33
      %s34 = sphi 0, %s31
      %s35 = sphi 0, %s34
      %s51 = sphi 0, %s35
      %s59 = sphi 0, %s61
      %s62 = sphi 0, %s59
      %s63 = sphi 0, %s62
      %s79 = sphi 0, %s63
      %s85 = sphi 0, %s87
      %s88 = sphi 0, %s85
      %s89 = sphi 0, %s88
      %s105 = sphi 0, %s89
      %s111 = sphi 0, %s113
      %s114 = sphi 0, %s111
      %s115 = sphi 0, %s114
      %s131 = sphi 0, %s115
    $region4: #{tpu_custom_call.1} parent=1 // loop_header_branch
      %24 = sbr.rel (%p22) target = $region8
    $region5: #{tpu_custom_call.1} parent=1 // loop_body
      %s26 = ssub.s32 %s21, 1
      %s27 = ssub.s32 %s21, 2
      %s28 = sadd.s32 %s21, 1
      %s29 = ssub.s32 %s21, %s28
      %p30 = scmp.eq.s32.totalorder %s29, 0
      %s32 = sadd.s32 %s31, 1
      %s33 = scalar_select %p30, %s31, %s32
      %p36 = pneg %p30
      %p37 = scmp.eq.s32.totalorder %s21, 1
      %p38 = por %p36, %p37
      %p39 = scmp.ne.s32.totalorder %s31, %s34
      %p40 = scmp.eq.s32.totalorder %s21, 0
      %p41 = por %p39, %p40
      %p42 = scmp.ne.s32.totalorder %s31, %s34
      %p43 = scmp.eq.s32.totalorder %s26, 1
      %p44 = por %p42, %p43
      %p45 = scmp.ne.s32.totalorder %s34, %s35
      %p46 = scmp.eq.s32.totalorder %s26, 0
      %p47 = por %p45, %p46
      %p48 = scmp.ne.s32.totalorder %s34, %s35
      %p49 = scmp.eq.s32.totalorder %s27, 1
      %p50 = por %p48, %p49
      %p52 = scmp.ne.s32.totalorder %s35, %s51
      %p53 = scmp.eq.s32.totalorder %s27, 0
      %p54 = por %p52, %p53
      %s55 = sld [smem:[#allocation3 + %s21]]
      %s56 = sld [smem:[#allocation3 + %s28]]
      %s57 = ssub.s32 %s55, %s56
      %p58 = scmp.eq.s32.totalorder %s57, 0
      %s60 = sadd.s32 %s59, 1
      %s61 = scalar_select %p58, %s59, %s60
      %p64 = pneg %p58
      %p65 = scmp.eq.s32.totalorder %s21, 1
      %p66 = por %p64, %p65
      %p67 = scmp.ne.s32.totalorder %s59, %s62
      %p68 = scmp.eq.s32.totalorder %s21, 0
      %p69 = por %p67, %p68
      %p70 = scmp.ne.s32.totalorder %s59, %s62
      %p71 = scmp.eq.s32.totalorder %s26, 1
      %p72 = por %p70, %p71
      %p73 = scmp.ne.s32.totalorder %s62, %s63
      %p74 = scmp.eq.s32.totalorder %s26, 0
      %p75 = por %p73, %p74
      %p76 = scmp.ne.s32.totalorder %s62, %s63
      %p77 = scmp.eq.s32.totalorder %s27, 1
      %p78 = por %p76, %p77
      %p80 = scmp.ne.s32.totalorder %s63, %s79
      %p81 = scmp.eq.s32.totalorder %s27, 0
      %p82 = por %p80, %p81
      %s83 = ssub.s32 %s21, %s28
      %p84 = scmp.eq.s32.totalorder %s83, 0
      %s86 = sadd.s32 %s85, 1
      %s87 = scalar_select %p84, %s85, %s86
      %p90 = pneg %p84
      %p91 = scmp.eq.s32.totalorder %s21, 1
      %p92 = por %p90, %p91
      %p93 = scmp.ne.s32.totalorder %s85, %s88
      %p94 = scmp.eq.s32.totalorder %s21, 0
      %p95 = por %p93, %p94
      %p96 = scmp.ne.s32.totalorder %s85, %s88
      %p97 = scmp.eq.s32.totalorder %s26, 1
      %p98 = por %p96, %p97
      %p99 = scmp.ne.s32.totalorder %s88, %s89
      %p100 = scmp.eq.s32.totalorder %s26, 0
      %p101 = por %p99, %p100
      %p102 = scmp.ne.s32.totalorder %s88, %s89
      %p103 = scmp.eq.s32.totalorder %s27, 1
      %p104 = por %p102, %p103
      %p106 = scmp.ne.s32.totalorder %s89, %s105
      %p107 = scmp.eq.s32.totalorder %s27, 0
      %p108 = por %p106, %p107
      %s109 = ssub.s32 %s21, %s28
      %p110 = scmp.eq.s32.totalorder %s109, 0
      %s112 = sadd.s32 %s111, 1
      %s113 = scalar_select %p110, %s111, %s112
      %p116 = pneg %p110
      %p117 = scmp.eq.s32.totalorder %s21, 1
      %p118 = por %p116, %p117
      %p119 = scmp.ne.s32.totalorder %s111, %s114
      %p120 = scmp.eq.s32.totalorder %s21, 0
      %p121 = por %p119, %p120
      %p122 = scmp.ne.s32.totalorder %s111, %s114
      %p123 = scmp.eq.s32.totalorder %s26, 1
      %p124 = por %p122, %p123
      %p125 = scmp.ne.s32.totalorder %s114, %s115
      %p126 = scmp.eq.s32.totalorder %s26, 0
      %p127 = por %p125, %p126
      %p128 = scmp.ne.s32.totalorder %s114, %s115
      %p129 = scmp.eq.s32.totalorder %s27, 1
      %p130 = por %p128, %p129
      %p132 = scmp.ne.s32.totalorder %s115, %s131
      %p133 = scmp.eq.s32.totalorder %s27, 0
      %p134 = por %p132, %p133
      %p135 = scmp.le.s32.totalorder 1, %s21
      %p136 = scmp.lt.s32.totalorder %s21, 3
      %p137 = pnand %p135, %p136
      %p138 = pneg %p137
      // Predicated region
      $region9: #{tpu_custom_call.1} parent=5 // pred_check
        _
      $region10: #{tpu_custom_call.1} parent=5 // pred_check_branch
        %140 = sbr.rel (%p137) target = $region12
      $region11: #{tpu_custom_call.1} parent=5 // pred_region
        %s141 = ssub.s32 %s21, 1
      $region12: #{tpu_custom_call.1} parent=5 // pred_fallthru
        _
      %p142 = scmp.lt.s32.totalorder %s21, 2
      // Predicated region
      $region13: #{tpu_custom_call.1} parent=5 // pred_check
        %p143 = pneg %p142
      $region14: #{tpu_custom_call.1} parent=5 // pred_check_branch
        %145 = sbr.rel (%p143) target = $region16
      $region15: #{tpu_custom_call.1} parent=5 // pred_region
        // Predicated region
        $region17: #{tpu_custom_call.1} parent=15 // pred_check
          %p146 = pneg %p41
        $region18: #{tpu_custom_call.1} parent=15 // pred_check_branch
          %148 = sbr.rel (%p146) target = $region20
        $region19: #{tpu_custom_call.1} parent=15 // pred_region
          %s149 = smul.u32 2, %s21
          %p150 = scmp.lt.s32.totalorder %s149, 3
          %s151 = scalar_select %p150, %s149, 3
          %s152 = smul.addr %s151, 4
          %s153 = scalar_lea.vmem %s1, %s152
          %s154 = smul.u32 2, %s21
        $region20: #{tpu_custom_call.1} parent=15 // pred_fallthru
          _
        // Predicated region
        $region21: #{tpu_custom_call.1} parent=15 // pred_check
          %p155 = pneg %p69
        $region22: #{tpu_custom_call.1} parent=15 // pred_check_branch
          %157 = sbr.rel (%p155) target = $region24
        $region23: #{tpu_custom_call.1} parent=15 // pred_region
          %s158 = sand.u32 %s59, 1
          %s159 = scalar_lea.sflag [#allocation5], %s158
          %s160 = sand.u32 %s59, 1
          %s161 = smul.addr %s160, 64
          %s162 = scalar_lea.vmem [#allocation4], %s161
          %s163 = sld [smem:[#allocation3 + %s21]]
          %165 = vsyncadd %s159, 0
          %s166 = smul.addr %s163, 16
          %s167 = smul.addr %s166, 4
          %s168 = scalar_lea.hbm %s2, %s167
          %s169 = sshll.u32 %s168, 4
          %s170 = int_to_ptr.hbm [resolvable:$true] %s169
          %s171 = sshll.u32 %s162, 4
          %s172 = int_to_ptr.vmem [resolvable:$true] %s171
          %177 = dma.hbm_to_vmem [thread:$0]  %s170, 1024, %s172, %s159, 64, 64, 4
        $region24: #{tpu_custom_call.1} parent=15 // pred_fallthru
          _
        // Predicated region
        $region25: #{tpu_custom_call.1} parent=15 // pred_check
          %p178 = pneg %p95
        $region26: #{tpu_custom_call.1} parent=15 // pred_check_branch
          %180 = sbr.rel (%p178) target = $region28
        $region27: #{tpu_custom_call.1} parent=15 // pred_region
          %s181 = smul.u32 2, %s21
          %p182 = scmp.lt.s32.totalorder %s181, 3
          %s183 = scalar_select %p182, %s181, 3
          %s184 = smul.addr %s183, 8
          %s185 = scalar_lea.vmem %s3, %s184
          %s186 = smul.u32 2, %s21
        $region28: #{tpu_custom_call.1} parent=15 // pred_fallthru
          _
      $region16: #{tpu_custom_call.1} parent=5 // pred_fallthru
        _
      %p187 = scmp.le.s32.totalorder 1, %s21
      %p188 = scmp.lt.s32.totalorder %s21, 3
      %p189 = pnand %p187, %p188
      %p190 = pneg %p189
      // Predicated region
      $region29: #{tpu_custom_call.1} parent=5 // pred_check
        _
      $region30: #{tpu_custom_call.1} parent=5 // pred_check_branch
        %192 = sbr.rel (%p189) target = $region32
      $region31: #{tpu_custom_call.1} parent=5 // pred_region
        %s193 = ssub.s32 %s21, 1
        %s194 = sand.u32 %s62, 1
        %s195 = scalar_lea.sflag [#allocation5], %s194
        %s196 = sand.u32 %s62, 1
        %s197 = smul.addr %s196, 64
        %s198 = scalar_lea.vmem [#allocation4], %s197
        // Predicated region
        $region33: #{tpu_custom_call.1} parent=31 // pred_check
          %p199 = pneg %p75
        $region34: #{tpu_custom_call.1} parent=31 // pred_check_branch
          %201 = sbr.rel (%p199) target = $region36
        $region35: #{tpu_custom_call.1} parent=31 // pred_region
          %203 = dma.done %s195, 1024
        $region36: #{tpu_custom_call.1} parent=31 // pred_fallthru
          _
        %s204 = smul.u32 2, %s26
        %p205 = scmp.lt.s32.totalorder %s204, 3
        %s206 = scalar_select %p205, %s204, 3
        %s207 = smul.addr %s206, 4
        %s208 = scalar_lea.vmem %s1, %s207
        %p209 = pneg %p47
        %p210 = pneg %p44
        %s211 = sand.u32 %s62, 1
        %s212 = scalar_lea.sflag [#allocation5], %s211
        %s213 = sand.u32 %s62, 1
        %s214 = smul.addr %s213, 64
        %s215 = scalar_lea.vmem [#allocation4], %s214
        %p216 = pneg %p75
        %p217 = pneg %p72
        %s218 = smul.u32 2, %s26
        %p219 = scmp.lt.s32.totalorder %s218, 3
        %s220 = scalar_select %p219, %s218, 3
        %s221 = smul.addr %s220, 8
        %s222 = scalar_lea.vmem %s3, %s221
        %p223 = pneg %p101
        %p224 = pneg %p98
        %p225 = pneg %p127
        %p226 = pneg %p124
        %s227 = smul.u32 2, %s26
        %p228 = scmp.lt.s32.totalorder %s227, 3
        %s229 = scalar_select %p228, %s227, 3
        %s230 = smul.addr %s229, 8
        %s231 = scalar_lea.vmem %s4, %s230
        %s232 = smul.u32 2, %s26
        %p233 = scmp.lt.s32.totalorder %s232, 3
        %s234 = scalar_select %p233, %s232, 3
        %s235 = smul.addr %s234, 4
        %s236 = scalar_lea.vmem %s1, %s235
        %s237 = smul.u32 2, %s26
        %s238 = sld [smem:[#allocation3 + %s26]]
        %s239 = smul.u32 2, %s26
        %p240 = scmp.lt.s32.totalorder %s239, 3
        %s241 = scalar_select %p240, %s239, 3
        %s242 = smul.addr %s241, 8
        %s243 = scalar_lea.vmem %s3, %s242
        %s244 = smul.u32 2, %s26
        %s245 = smul.u32 2, %s26
        %p246 = scmp.lt.s32.totalorder %s245, 3
        %s247 = scalar_select %p246, %s245, 3
        %s248 = smul.addr %s247, 8
        %s249 = scalar_lea.vmem %s4, %s248
        %s250 = smul.u32 2, %s26
        %v251 = vld [vmem:[%s236] sm:$0xf]
        %v252 = vld [vmem:[%s236 + $0x4] sm:$0xf]
        %v253 = vld [vmem:[%s198] sm:$0xf]
        %v254 = vld [vmem:[%s198 + $0x4] sm:$0xf]
        %v255 = vld [vmem:[%s198 + $0x8] sm:$0xf]
        %v256 = vld [vmem:[%s198 + $0xc] sm:$0xf]
        %v257 = vld [vmem:[%s198 + $0x10] sm:$0xf]
        %v258 = vld [vmem:[%s198 + $0x14] sm:$0xf]
        %v259 = vld [vmem:[%s198 + $0x18] sm:$0xf]
        %v260 = vld [vmem:[%s198 + $0x1c] sm:$0xf]
        %v261 = vld [vmem:[%s198 + $0x20] sm:$0xf]
        %v262 = vld [vmem:[%s198 + $0x24] sm:$0xf]
        %v263 = vld [vmem:[%s198 + $0x28] sm:$0xf]
        %v264 = vld [vmem:[%s198 + $0x2c] sm:$0xf]
        %v265 = vld [vmem:[%s198 + $0x30] sm:$0xf]
        %v266 = vld [vmem:[%s198 + $0x34] sm:$0xf]
        %v267 = vld [vmem:[%s198 + $0x38] sm:$0xf]
        %v268 = vld [vmem:[%s198 + $0x3c] sm:$0xf]
        %v271 = vunpack.c.l.b16 %v251
        %v272 = vunpack.c.l.b16 %v252
        %v273 = vpack.c.b16 %v272, %v271
        %v291 = vunpack.c.l.b16 %v253
        %v292 = vunpack.c.l.b16 %v254
        %v293 = vunpack.c.l.b16 %v255
        %v294 = vunpack.c.l.b16 %v256
        %v295 = vunpack.c.l.b16 %v257
        %v296 = vunpack.c.l.b16 %v258
        %v297 = vunpack.c.l.b16 %v259
        %v298 = vunpack.c.l.b16 %v260
        %v299 = vunpack.c.l.b16 %v261
        %v300 = vunpack.c.l.b16 %v262
        %v301 = vunpack.c.l.b16 %v263
        %v302 = vunpack.c.l.b16 %v264
        %v303 = vunpack.c.l.b16 %v265
        %v304 = vunpack.c.l.b16 %v266
        %v305 = vunpack.c.l.b16 %v267
        %v306 = vunpack.c.l.b16 %v268
        %v307 = vpack.c.b16 %v292, %v291
        %v308 = vpack.c.b16 %v294, %v293
        %v309 = vpack.c.b16 %v296, %v295
        %v310 = vpack.c.b16 %v298, %v297
        %v311 = vpack.c.b16 %v300, %v299
        %v312 = vpack.c.b16 %v302, %v301
        %v313 = vpack.c.b16 %v304, %v303
        %v314 = vpack.c.b16 %v306, %v305
        %323 = vmatpush.bf16.msra.mxu0 %v314
        %324 = vmatpush.bf16.msra.mxu0 %v313
        %325 = vmatpush.bf16.msra.mxu0 %v312
        %326 = vmatpush.bf16.msra.mxu0 %v311
        %327 = vmatpush.bf16.msra.mxu0 %v310
        %328 = vmatpush.bf16.msra.mxu0 %v309
        %329 = vmatpush.bf16.msra.mxu0 %v308
        %330 = vmatpush.bf16.msra.mxu0 %v307
        %331 = vmatmul.bf16.gmra.mxu0 %v273
        %v332 = vpop.f32.mrf.mxu0
        %v333 = vadd.f32 0.0, %v332
        %v334 = vpop.f32.mrf.mxu0
        %v335 = vadd.f32 0.0, %v334
        %336 = vdwg.mxu0
        %337 = vmax.xlane.f32.xlu0 %v333
        %v338 = vpop.xlane.xlu0 %337
        %339 = vmax.xlane.f32.xlu0 %v335
        %v340 = vpop.xlane.xlu0 %339
        %v341 = vsub.f32 %v333, %v338
        %v342 = vsub.f32 %v335, %v340
        %v343 = vmul.f32 %v341, 1.442695
        %v344 = vpow.pop %v343
        %v345 = vmul.f32 %v342, 1.442695
        %v346 = vpow.pop %v345
        %347 = vadd.xlane.f32.xlu0 %v344
        %v348 = vpop.xlane.xlu0 %347
        %349 = vadd.xlane.f32.xlu0 %v346
        %v350 = vpop.xlane.xlu0 %349
        %v351 = vlog2.pop %v348
        %v352 = vmul.f32 %v351, 0.6931472
        %v353 = vlog2.pop %v350
        %v354 = vmul.f32 %v353, 0.6931472
        %v355 = vld [vmem:[%s243] sm:$0xff]
        %v356 = vld [vmem:[%s243 + $0x8] sm:$0xff]
        %v357 = vlaneseq
        %v358 = vand.u32 %v357, 127
        %359 = vset.pattern.permute.xlu0 0
        %360 = vperm.xlu0 %359, %v355
        %v361 = vpop.permute.xlu0 %360
        %362 = vset.pattern.permute.xlu0 0
        %363 = vperm.xlu0 %362, %v356
        %v364 = vpop.permute.xlu0 %363
        %vm365 = vcmp.eq.s32.totalorder %v358, %v361
        %vm366 = vcmp.eq.s32.totalorder %v358, %v364
        %v367 = vsel %vm365, %v341, 0.0
        %v368 = vsel %vm366, %v342, 0.0
        %369 = vadd.xlane.f32.xlu0 %v367
        %v370 = vpop.xlane.xlu0 %369
        %371 = vadd.xlane.f32.xlu0 %v368
        %v372 = vpop.xlane.xlu0 %371
        %v373 = vsub.f32 %v352, %v370
        %v374 = vsub.f32 %v354, %v372
        %vm375 = vcmp.lt.s32.totalorder %v358, 16
        %v376 = vsel %vm375, %v341, 0.0
        %v377 = vsel %vm375, %v342, 0.0
        %378 = vadd.xlane.f32.xlu0 %v376
        %v379 = vpop.xlane.xlu0 %378
        %380 = vadd.xlane.f32.xlu0 %v377
        %v381 = vpop.xlane.xlu0 %380
        %v382 = vmul.f32 %v379, 0.0625
        %v383 = vmul.f32 %v381, 0.0625
        %v384 = vsub.f32 %v352, %v382
        %v385 = vsub.f32 %v354, %v383
        %v386 = vmul.f32 %v373, 0.9
        %v387 = vmul.f32 %v374, 0.9
        %v388 = vmul.f32 %v384, 0.1
        %v389 = vmul.f32 %v385, 0.1
        %v390 = vadd.f32 %v386, %v388
        %v391 = vadd.f32 %v387, %v389
        %vm392 = vcmp.eq.s32.totalorder %v355, 0
        %vm393 = vcmp.eq.s32.totalorder %v356, 0
        %v394 = vsel %vm392, 0.0, %v390
        %v395 = vsel %vm393, 0.0, %v391
        %vm396 = vcmp.eq.f32.partialorder %v341, 0.0
        %vm397 = vcmp.eq.f32.partialorder %v342, 0.0
        %v398 = vsel %vm396, %v358, 128
        %v399 = vsel %vm397, %v358, 128
        %v400 = vand.u32 %v398, 65535
        %v401 = vshra.s32 %v398, 16
        %v402 = vcvt.s32.f32 %v400
        %v403 = vcvt.s32.f32 %v401
        %404 = vmin.xlane.f32.xlu0 %v403
        %v405 = vpop.xlane.xlu0 %404
        %vm406 = vcmp.eq.f32.partialorder %v403, %v405
        %v407 = vsel %vm406, %v402, inf
        %408 = vmin.xlane.f32.xlu0 %v407
        %v409 = vpop.xlane.xlu0 %408
        %v410 = vcvt.f32.s32 %v409
        %v411 = vcvt.f32.s32 %v405
        %v412 = vshll.u32 %v411, 16
        %v413 = vadd.s32 %v412, %v410
        %v414 = vand.u32 %v399, 65535
        %v415 = vshra.s32 %v399, 16
        %v416 = vcvt.s32.f32 %v414
        %v417 = vcvt.s32.f32 %v415
        %418 = vmin.xlane.f32.xlu0 %v417
        %v419 = vpop.xlane.xlu0 %418
        %vm420 = vcmp.eq.f32.partialorder %v417, %v419
        %v421 = vsel %vm420, %v416, inf
        %422 = vmin.xlane.f32.xlu0 %v421
        %v423 = vpop.xlane.xlu0 %422
        %v424 = vcvt.f32.s32 %v423
        %v425 = vcvt.f32.s32 %v419
        %v426 = vshll.u32 %v425, 16
        %v427 = vadd.s32 %v426, %v424
        %v428 = vcvt.s32.f32 %v413
        %v429 = vcvt.s32.f32 %v427
        %vm430 = vcmask 7168
        %431 = vst.msk [vmem:[%s249] sm:$0xff] %vm430, %v394
        %432 = vst.msk [vmem:[%s249 + $0x8] sm:$0xff] %vm430, %v395
        %vm433 = vcmask 15368
        %434 = vst.msk [vmem:[%s249] sm:$0xff] %vm433, %v428
        %435 = vst.msk [vmem:[%s249 + $0x8] sm:$0xff] %vm433, %v429
        %s436 = smul.u32 2, %s26
        %p437 = scmp.lt.s32.totalorder %s436, 3
        %s438 = scalar_select %p437, %s436, 3
        %s439 = smul.addr %s438, 8
        %s440 = scalar_lea.vmem %s4, %s439
        // Predicated region
        $region37: #{tpu_custom_call.1} parent=31 // pred_check
          %p441 = pneg %p124
        $region38: #{tpu_custom_call.1} parent=31 // pred_check_branch
          %443 = sbr.rel (%p441) target = $region40
        $region39: #{tpu_custom_call.1} parent=31 // pred_region
          %s444 = smul.u32 2, %s26
        $region40: #{tpu_custom_call.1} parent=31 // pred_fallthru
          _
      $region32: #{tpu_custom_call.1} parent=5 // pred_fallthru
        _
      %p445 = scmp.le.s32.totalorder 2, %s21
      // Predicated region
      $region41: #{tpu_custom_call.1} parent=5 // pred_check
        %p446 = pneg %p445
      $region42: #{tpu_custom_call.1} parent=5 // pred_check_branch
        %448 = sbr.rel (%p446) target = $region44
      $region43: #{tpu_custom_call.1} parent=5 // pred_region
        %s449 = ssub.s32 %s21, 2
        // Predicated region
        $region45: #{tpu_custom_call.1} parent=43 // pred_check
          %p450 = pneg %p130
        $region46: #{tpu_custom_call.1} parent=43 // pred_check_branch
          %452 = sbr.rel (%p450) target = $region48
        $region47: #{tpu_custom_call.1} parent=43 // pred_region
          %s453 = smul.u32 2, %s27
          %p454 = scmp.lt.s32.totalorder %s453, 3
          %s455 = scalar_select %p454, %s453, 3
          %s456 = smul.addr %s455, 8
          %s457 = scalar_lea.vmem %s4, %s456
        $region48: #{tpu_custom_call.1} parent=43 // pred_fallthru
          _
      $region44: #{tpu_custom_call.1} parent=5 // pred_fallthru
        _
    $region6: #{tpu_custom_call.1} parent=1 // loop_footer
      %s25 = sadd.s32 1, %s21
    $region7: #{tpu_custom_call.1} parent=1 // loop_footer_branch
      %20 = sbr.rel target = $region3
    $region8: #{tpu_custom_call.1} parent=1 // loop_exit
      _
    %458 = vsyncpa [#allocation5], 1
    %s459 = scalar_lea.sflag [#allocation5], 1
    %460 = vsyncpa %s459, 1

</llo_original>
